<compile_context>
chip_gen: v6e
topology: v6e:2x2x1
jax: 0.10.0
libtpu: 0.0.40
codegen_flags: <defaults>
</compile_context>

<pallas_src>
import math

import jax
import jax.numpy as jnp
from jax.experimental import pallas as pl
from jax.experimental.pallas import tpu as pltpu

_MiB = 1024 * 1024


def _round_up(x, m):
    return ((x + m - 1) // m) * m


def _vmem_capacity_bytes():
    try:
        return int(pltpu.get_tpu_info().vmem_capacity_bytes)
    except Exception:
        return 64 * _MiB  # conservative (v7x-sized) fallback


def _pad2d(a, rows, cols):
    pr, pc = rows - a.shape[0], cols - a.shape[1]
    if pr == 0 and pc == 0:
        return a
    return jnp.pad(a, ((0, pr), (0, pc)))


def _vmem_footprint(tile_m, tile_i, hidden_p, cbytes, out_bytes, use_scratch):
    est = (2 * tile_m * hidden_p * cbytes        # x tile (double-buffered)
           + 2 * hidden_p * tile_i * cbytes      # w1 tile
           + 2 * tile_i * hidden_p * cbytes      # w2 tile
           + 2 * tile_m * hidden_p * out_bytes   # out tile
           + 2 * 8 * (tile_i + hidden_p) * 4)    # biases (sublane-padded)
    if use_scratch:
        est += tile_m * hidden_p * 4             # f32 accumulator scratch
    return est


def _ffn_kernel_acc_out(x_ref, w1_ref, b1_ref, w2_ref, b2_ref, o_ref):
    """f32-output variant: accumulate directly into the resident output block."""
    k = pl.program_id(1)

    @pl.when(k == 0)
    def _():
        o_ref[...] = jnp.zeros_like(o_ref)

    # fc1 on this inner tile: (tm, H) @ (H, ti) -> f32, + b1 slice, ReLU
    h1 = jnp.dot(x_ref[...], w1_ref[...], preferred_element_type=jnp.float32)
    h1 = jnp.maximum(h1 + b1_ref[...], 0.0)
    # dropout == identity (eval mode)
    # partial fc2: (tm, ti) @ (ti, H), accumulated into the f32 output block
    o_ref[...] += jnp.dot(h1.astype(w2_ref.dtype), w2_ref[...],
                          preferred_element_type=jnp.float32)

    @pl.when(k == pl.num_programs(1) - 1)
    def _():
        o_ref[...] = o_ref[...] + b2_ref[...]


def _ffn_kernel_scratch(x_ref, w1_ref, b1_ref, w2_ref, b2_ref, o_ref, acc_ref):
    """Non-f32-output variant: f32 VMEM scratch accumulator, cast at the end."""
    k = pl.program_id(1)

    @pl.when(k == 0)
    def _():
        acc_ref[...] = jnp.zeros_like(acc_ref)

    h1 = jnp.dot(x_ref[...], w1_ref[...], preferred_element_type=jnp.float32)
    h1 = jnp.maximum(h1 + b1_ref[...], 0.0)
    acc_ref[...] += jnp.dot(h1.astype(w2_ref.dtype), w2_ref[...],
                            preferred_element_type=jnp.float32)

    @pl.when(k == pl.num_programs(1) - 1)
    def _():
        o_ref[...] = (acc_ref[...] + b2_ref[...]).astype(o_ref.dtype)


def make_ffn(w1, b1, w2, b2, *, tile_m=None, tile_i=None,
             compute_dtype=jnp.bfloat16, out_dtype=None):
    """Prepare (cast + pad) the static weights once and return apply(h).

    w1: (hidden, inner), w2: (inner, hidden)  (transpose of PyTorch nn.Linear.weight).
    """
    hidden, inner = w1.shape
    cdt = jnp.dtype(compute_dtype)
    cbytes = cdt.itemsize

    vmem_cap = _vmem_capacity_bytes()
    big_vmem = vmem_cap >= 100 * _MiB          # v5e / v6e (128 MiB) vs v7x (64 MiB)

    # Generation-aware default tiles (weights are re-streamed once per row tile, so
    # bigger tile_m raises arithmetic intensity on weight HBM traffic).
    if tile_m is None:
        tile_m = 512 if big_vmem else 256
    if tile_i is None:
        tile_i = 1024 if big_vmem else 512

    hidden_p = _round_up(hidden, 128)
    tile_i = min(tile_i, _round_up(inner, 128))

    # Footprint guard (matters on v7x's 64 MiB VMEM with large hidden dims):
    # prefer shrinking tile_i to 256, then tile_m to 128, then tile_i to 128.
    budget = max(24 * _MiB, vmem_cap - 8 * _MiB)

    def _fits(tm, ti):
        return _vmem_footprint(tm, ti, hidden_p, cbytes, 4, True) * 1.2 <= budget

    while tile_i > 256 and not _fits(tile_m, tile_i):
        tile_i //= 2
    while tile_m > 128 and not _fits(tile_m, tile_i):
        tile_m //= 2
    while tile_i > 128 and not _fits(tile_m, tile_i):
        tile_i //= 2

    inner_p = _round_up(inner, tile_i)

    # Hoisted weight cast + pad (done once; pads skipped when already aligned).
    w1_p = _pad2d(w1 if w1.dtype == cdt else w1.astype(cdt), hidden_p, inner_p)
    w2_p = _pad2d(w2 if w2.dtype == cdt else w2.astype(cdt), inner_p, hidden_p)
    b1_p = _pad2d(b1.astype(jnp.float32).reshape(1, inner), 1, inner_p)
    b2_p = _pad2d(b2.astype(jnp.float32).reshape(1, hidden), 1, hidden_p)

    def apply(h):
        batch, seq, h_dim = h.shape
        assert h_dim == hidden
        odt = jnp.dtype(out_dtype) if out_dtype is not None else h.dtype
        out_bytes = odt.itemsize
        use_scratch = odt != jnp.dtype(jnp.float32)

        M = batch * seq
        tm = min(tile_m, _round_up(M, 8))
        M_p = _round_up(M, tm)
        # Megacore: guarantee >= 2 row tiles when M allows (v7x has 2 TCs/chip).
        if M_p // tm < 2 and tm >= 16:
            tm = _round_up(tm // 2, 8)
            M_p = _round_up(M, tm)

        x = h.reshape(M, hidden)
        if x.dtype != cdt:
            x = x.astype(cdt)
        x = _pad2d(x, M_p, hidden_p)

        grid = (M_p // tm, inner_p // tile_i)
        n_row_tiles = grid[0]

        vmem_est = _vmem_footprint(tm, tile_i, hidden_p, cbytes, out_bytes,
                                   use_scratch)
        vmem_limit = int(min(max(int(vmem_est * 1.5), 32 * _MiB),
                             max(32 * _MiB, vmem_cap - 8 * _MiB)))

        cost = pl.CostEstimate(
            flops=4 * M_p * hidden_p * inner_p,     # two matmuls
            transcendentals=0,
            bytes_accessed=int(
                M_p * hidden_p * cbytes                             # x read
                + M_p * hidden_p * out_bytes                        # out write
                + n_row_tiles * 2 * hidden_p * inner_p * cbytes     # w1+w2 re-reads
                + n_row_tiles * (inner_p + hidden_p) * 4),          # biases
        )

        kernel = _ffn_kernel_scratch if use_scratch else _ffn_kernel_acc_out
        scratch = ([pltpu.VMEM((tm, hidden_p), jnp.float32)]
                   if use_scratch else [])

        out = pl.pallas_call(
            kernel,
            out_shape=jax.ShapeDtypeStruct((M_p, hidden_p), odt),
            grid_spec=pltpu.PrefetchScalarGridSpec(
                num_scalar_prefetch=0,
                grid=grid,
                in_specs=[
                    pl.BlockSpec((tm, hidden_p), lambda i, k: (i, 0)),   # x row tile
                    pl.BlockSpec((hidden_p, tile_i), lambda i, k: (0, k)),  # w1 col tile
                    pl.BlockSpec((1, tile_i), lambda i, k: (0, k)),      # b1 slice
                    pl.BlockSpec((tile_i, hidden_p), lambda i, k: (k, 0)),  # w2 row tile
                    pl.BlockSpec((1, hidden_p), lambda i, k: (0, 0)),    # b2 (full)
                ],
                out_specs=pl.BlockSpec((tm, hidden_p), lambda i, k: (i, 0)),
                scratch_shapes=scratch,
            ),
            compiler_params=pltpu.CompilerParams(
                dimension_semantics=("parallel", "arbitrary"),
                vmem_limit_bytes=vmem_limit),
            cost_estimate=cost,
        )(x, w1_p, b1_p, w2_p, b2_p)

        return out[:M, :hidden].reshape(batch, seq, hidden)

    return apply


def feed_forward_layer(h, w1, b1, w2, b2, *, tile_m=None, tile_i=None,
                       compute_dtype=jnp.bfloat16, out_dtype=None):
    """Convenience wrapper: h: (batch, seq, hidden) -> (batch, seq, hidden)."""
    return make_ffn(w1, b1, w2, b2, tile_m=tile_m, tile_i=tile_i,
                    compute_dtype=compute_dtype, out_dtype=out_dtype)(h)


def init_params(key, hidden_size, inner_hidden_size, dtype=jnp.float32):
    """Deterministic init mimicking nn.Linear (uniform(-1/sqrt(fan_in), ...))."""
    k1, k2, k3, k4 = jax.random.split(key, 4)
    bound1 = 1.0 / math.sqrt(hidden_size)
    bound2 = 1.0 / math.sqrt(inner_hidden_size)
    w1 = jax.random.uniform(k1, (hidden_size, inner_hidden_size),
                            dtype, -bound1, bound1)
    b1 = jax.random.uniform(k2, (inner_hidden_size,), dtype, -bound1, bound1)
    w2 = jax.random.uniform(k3, (inner_hidden_size, hidden_size),
                            dtype, -bound2, bound2)
    b2 = jax.random.uniform(k4, (hidden_size,), dtype, -bound2, bound2)
    return w1, b1, w2, b2


if __name__ == "__main__":
    batch, seq = 2, 8
    hidden_size, inner_hidden_size = 32, 64
    dropout = 0.1  # inactive in eval mode

    key = jax.random.PRNGKey(0)
    k_x, k_p = jax.random.split(key)
    h = jax.random.normal(k_x, (batch, seq, hidden_size), jnp.float32)
    w1, b1, w2, b2 = init_params(k_p, hidden_size, inner_hidden_size)

    # Plain-JAX reference (eval-mode module: dropout is identity).
    ref = jnp.maximum(h.reshape(-1, hidden_size) @ w1 + b1, 0.0) @ w2 + b2
    ref = ref.reshape(batch, seq, hidden_size)

    # Default path: bf16 compute with f32 accumulation -> bf16-level tolerance.
    out_bf16 = feed_forward_layer(h, w1, b1, w2, b2)
    out_bf16 = jax.block_until_ready(out_bf16)
    assert out_bf16.shape == (batch, seq, hidden_size)
    assert jnp.allclose(out_bf16, ref, atol=3e-2, rtol=3e-2), \
        float(jnp.max(jnp.abs(out_bf16 - ref)))

    # f32 compute path -> tight tolerance.
    out_f32 = feed_forward_layer(h, w1, b1, w2, b2, compute_dtype=jnp.float32)
    out_f32 = jax.block_until_ready(out_f32)
    assert jnp.allclose(out_f32, ref, atol=1e-5, rtol=1e-5)

    print("KERNEL_OK")
</pallas_src>

<mosaic_0001>
module attributes {stable_mosaic.version = 11 : i64} {
  func.func @_ffn_kernel_acc_out(%arg0: i32, %arg1: i32, %arg2: memref<8x128xbf16, #tpu.memory_space<vmem>>, %arg3: memref<128x128xbf16, #tpu.memory_space<vmem>>, %arg4: memref<1x128xf32, #tpu.memory_space<vmem>>, %arg5: memref<128x128xbf16, #tpu.memory_space<vmem>>, %arg6: memref<1x128xf32, #tpu.memory_space<vmem>>, %arg7: memref<8x128xf32, #tpu.memory_space<vmem>>) attributes {dimension_semantics = [#tpu.dimension_semantics<parallel>, #tpu.dimension_semantics<arbitrary>], iteration_bounds = array<i64: 2, 1>, scalar_prefetch = 0 : i64, scratch_operands = 0 : i64, tpu.core_type = #tpu.core_type<tc>, window_params = [{transform_indices = @transform_0, window_bounds = array<i64: 8, 128>}, {transform_indices = @transform_1, window_bounds = array<i64: 128, 128>}, {transform_indices = @transform_2, window_bounds = array<i64: 1, 128>}, {transform_indices = @transform_3, window_bounds = array<i64: 128, 128>}, {pipeline_mode = #tpu.pipeline_mode<synchronous>, transform_indices = @transform_4, window_bounds = array<i64: 1, 128>}, {transform_indices = @transform_5, window_bounds = array<i64: 8, 128>}]} {
    %c0_i32 = arith.constant 0 : i32
    %0 = arith.cmpi eq, %arg1, %c0_i32 : i32
    %1 = arith.extui %0 : i1 to i32
    %c0_i32_0 = arith.constant 0 : i32
    %2 = arith.cmpi ne, %1, %c0_i32_0 : i32
    scf.if %2 {
      %cst_16 = arith.constant 0.000000e+00 : f32
      %20 = vector.broadcast %cst_16 : f32 to vector<8x128xf32>
      %c0_17 = arith.constant 0 : index
      %c0_18 = arith.constant 0 : index
      %21 = vector.load %arg7[%c0_17, %c0_18] : memref<8x128xf32, #tpu.memory_space<vmem>>, vector<8x128xf32>
      tpu.vector_store %arg7[%c0_17, %c0_18], %20 {strides = array<i32>} : memref<8x128xf32, #tpu.memory_space<vmem>>, vector<8x128xf32>,
    } else {
    }
    %c0 = arith.constant 0 : index
    %c0_1 = arith.constant 0 : index
    %3 = vector.load %arg2[%c0, %c0_1] : memref<8x128xbf16, #tpu.memory_space<vmem>>, vector<8x128xbf16>
    %c0_2 = arith.constant 0 : index
    %c0_3 = arith.constant 0 : index
    %4 = vector.load %arg3[%c0_2, %c0_3] : memref<128x128xbf16, #tpu.memory_space<vmem>>, vector<128x128xbf16>
    %cst = arith.constant dense<0.000000e+00> : vector<8x128xf32>
    %5 = tpu.matmul %3, %4, %cst {dimension_numbers = #tpu.dot_dimension_numbers<[1], [0], [0], [1], [0, 0, 1, 1], [], []>} : vector<8x128xbf16>, vector<128x128xbf16>, vector<8x128xf32> -> vector<8x128xf32>
    %c0_4 = arith.constant 0 : index
    %c0_5 = arith.constant 0 : index
    %6 = vector.load %arg4[%c0_4, %c0_5] : memref<1x128xf32, #tpu.memory_space<vmem>>, vector<1x128xf32>
    %7 = vector.broadcast %6 : vector<1x128xf32> to vector<8x128xf32>
    %8 = arith.addf %5, %7 : vector<8x128xf32>
    %cst_6 = arith.constant 0.000000e+00 : f32
    %9 = vector.broadcast %cst_6 : f32 to vector<8x128xf32>
    %10 = arith.maximumf %8, %9 : vector<8x128xf32>
    %c0_7 = arith.constant 0 : index
    %c0_8 = arith.constant 0 : index
    %11 = vector.load %arg7[%c0_7, %c0_8] : memref<8x128xf32, #tpu.memory_space<vmem>>, vector<8x128xf32>
    %12 = arith.truncf %10 : vector<8x128xf32> to vector<8x128xbf16>
    %c0_9 = arith.constant 0 : index
    %c0_10 = arith.constant 0 : index
    %13 = vector.load %arg5[%c0_9, %c0_10] : memref<128x128xbf16, #tpu.memory_space<vmem>>, vector<128x128xbf16>
    %cst_11 = arith.constant dense<0.000000e+00> : vector<8x128xf32>
    %14 = tpu.matmul %12, %13, %cst_11 {dimension_numbers = #tpu.dot_dimension_numbers<[1], [0], [0], [1], [0, 0, 1, 1], [], []>} : vector<8x128xbf16>, vector<128x128xbf16>, vector<8x128xf32> -> vector<8x128xf32>
    %15 = arith.addf %11, %14 : vector<8x128xf32>
    %c0_12 = arith.constant 0 : index
    %c0_13 = arith.constant 0 : index
    %16 = vector.load %arg7[%c0_12, %c0_13] : memref<8x128xf32, #tpu.memory_space<vmem>>, vector<8x128xf32>
    tpu.vector_store %arg7[%c0_12, %c0_13], %15 {strides = array<i32>} : memref<8x128xf32, #tpu.memory_space<vmem>>, vector<8x128xf32>,
    %c0_i32_14 = arith.constant 0 : i32
    %17 = arith.cmpi eq, %arg1, %c0_i32_14 : i32
    %18 = arith.extui %17 : i1 to i32
    %c0_i32_15 = arith.constant 0 : i32
    %19 = arith.cmpi ne, %18, %c0_i32_15 : i32
    scf.if %19 {
      %c0_16 = arith.constant 0 : index
      %c0_17 = arith.constant 0 : index
      %20 = vector.load %arg7[%c0_16, %c0_17] : memref<8x128xf32, #tpu.memory_space<vmem>>, vector<8x128xf32>
      %c0_18 = arith.constant 0 : index
      %c0_19 = arith.constant 0 : index
      %21 = vector.load %arg6[%c0_18, %c0_19] : memref<1x128xf32, #tpu.memory_space<vmem>>, vector<1x128xf32>
      %22 = vector.broadcast %21 : vector<1x128xf32> to vector<8x128xf32>
      %23 = arith.addf %20, %22 : vector<8x128xf32>
      %c0_20 = arith.constant 0 : index
      %c0_21 = arith.constant 0 : index
      %24 = vector.load %arg7[%c0_20, %c0_21] : memref<8x128xf32, #tpu.memory_space<vmem>>, vector<8x128xf32>
      tpu.vector_store %arg7[%c0_20, %c0_21], %23 {strides = array<i32>} : memref<8x128xf32, #tpu.memory_space<vmem>>, vector<8x128xf32>,
    } else {
    }
    return
  }
  func.func @transform_0(%arg0: i32, %arg1: i32) -> (i32, i32) {
    %c0_i32 = arith.constant 0 : i32
    %c0_i32_0 = arith.constant 0 : i32
    return %arg0, %c0_i32 : i32, i32
  }
  func.func @transform_1(%arg0: i32, %arg1: i32) -> (i32, i32) {
    %c0_i32 = arith.constant 0 : i32
    %c0_i32_0 = arith.constant 0 : i32
    return %c0_i32, %arg1 : i32, i32
  }
  func.func @transform_2(%arg0: i32, %arg1: i32) -> (i32, i32) {
    %c0_i32 = arith.constant 0 : i32
    %c0_i32_0 = arith.constant 0 : i32
    return %c0_i32, %arg1 : i32, i32
  }
  func.func @transform_3(%arg0: i32, %arg1: i32) -> (i32, i32) {
    %c0_i32 = arith.constant 0 : i32
    %c0_i32_0 = arith.constant 0 : i32
    return %arg1, %c0_i32 : i32, i32
  }
  func.func @transform_4(%arg0: i32, %arg1: i32) -> (i32, i32) {
    %c0_i32 = arith.constant 0 : i32
    %c0_i32_0 = arith.constant 0 : i32
    %c0_i32_1 = arith.constant 0 : i32
    return %c0_i32, %c0_i32_0 : i32, i32
  }
  func.func @transform_5(%arg0: i32, %arg1: i32) -> (i32, i32) {
    %c0_i32 = arith.constant 0 : i32
    %c0_i32_0 = arith.constant 0 : i32
    return %arg0, %c0_i32 : i32, i32
  }
}

</mosaic_0001>

<llo_original>
// kernel: tpu_custom_call.1
$region0: #{tpu_custom_call.1}
  #allocation0 [shape = 'u32[]', space=smem, size = 0x4, offset = 0x4, fixed_abs, tag = 'smem constant byte address 0x4 - core index']
  #allocation1 [shape = 'u32[144,128]{1,0:T(1,128)}', space=vmem, size = 0x12000, scoped, tag = 'internal scratch']
  %s0 = inlined_call_operand.hbm [shape: bf16[16,128], index: 0, kind: input, shape index: {}]
  %s1 = inlined_call_operand.hbm [shape: bf16[128,128], index: 1, kind: input, shape index: {}]
  %s2 = inlined_call_operand.vmem [shape: f32[1,128], index: 2, kind: input, shape index: {}]
  %s3 = inlined_call_operand.hbm [shape: bf16[128,128], index: 3, kind: input, shape index: {}]
  %s4 = inlined_call_operand.vmem [shape: f32[1,128], index: 4, kind: input, shape index: {}]
  %s5 = inlined_call_operand.hbm [shape: f32[16,128], index: 5, kind: output, shape index: {}]
  %s6 = sld [smem:[#allocation0]]
  $region73: #{tpu_custom_call.1} parent=0
    _
  %s8 = ssub.s32 1, %s6
  %s9 = scalar_select 0, %s8, %s6
  $region1: #{tpu_custom_call.1} parent=0
    #allocation2 [shape = 'u8[4096]{0}', space=vmem, size = 0x1000, scoped, tag = 'input window, operand 0']
    #allocation3 [shape = 's32[2]{0}', space=sflag, size = 0x8, scoped, tag = 'scoped memory for tpu_custom_call.1']
    #allocation4 [shape = 's32[2]{0}', space=sflag, size = 0x8, scoped, tag = 'scoped memory for tpu_custom_call.1']
    #allocation5 [shape = 'u8[32768]{0}', space=vmem, size = 0x8000, scoped, tag = 'input window, operand 1, single buffered']
    #allocation6 [shape = 's32[1]{0}', space=sflag, size = 0x4, scoped, tag = 'scoped memory for tpu_custom_call.1']
    #allocation7 [shape = 'u8[32768]{0}', space=vmem, size = 0x8000, scoped, tag = 'input window, operand 3, single buffered']
    #allocation8 [shape = 'u8[8192]{0}', space=vmem, size = 0x2000, scoped, tag = 'output window, operand 0']
    %10 = vsyncpa [#allocation3], 0
    %s11 = scalar_lea.sflag [#allocation3], 1
    %12 = vsyncpa %s11, 0
    %13 = vsyncpa [#allocation6], 0
    %14 = vsyncpa [#allocation4], 0
    %s15 = scalar_lea.sflag [#allocation4], 1
    %16 = vsyncpa %s15, 0
    loop: start=0, step=1, limit=4
    $region2: #{tpu_custom_call.1} parent=1 // loop_pre_header
      _
    $region3: #{tpu_custom_call.1} parent=1 // loop_header
      %s18 = sphi 0, %s22
      %p19 = scmp.ge.s32.totalorder %s18, 4
      %s25 = sphi 0, %s37
      %s26 = sphi 0, %s33
      %s27 = sphi 0, %s25
      %s28 = sphi 0, %s26
      %s29 = sphi 0, %s27
      %s30 = sphi 0, %s28
      %s40 = sphi 0, %s42
      %s43 = sphi 0, %s40
      %s44 = sphi 0, %s43
      %s60 = sphi 0, %s44
      %s66 = sphi 0, %s68
      %s69 = sphi 0, %s66
      %s70 = sphi 0, %s69
      %s86 = sphi 0, %s70
      %s92 = sphi 0, %s94
      %s95 = sphi 0, %s92
      %s96 = sphi 0, %s95
      %s112 = sphi 0, %s96
      %s118 = sphi 0, %s120
      %s121 = sphi 0, %s118
      %s122 = sphi 0, %s121
      %s138 = sphi 0, %s122
      %s142 = sphi 0, %s142
      %s144 = sphi 0, %s142
      %s145 = sphi 0, %s144
      %s159 = sphi 0, %s145
      %s165 = sphi 0, %s167
      %s168 = sphi 0, %s165
      %s169 = sphi 0, %s168
      %s185 = sphi 0, %s169
    $region4: #{tpu_custom_call.1} parent=1 // loop_header_branch
      %21 = sbr.rel (%p19) target = $region8
    $region5: #{tpu_custom_call.1} parent=1 // loop_body
      %s23 = ssub.s32 %s18, 1
      %s24 = ssub.s32 %s18, 2
      %s31 = sadd.s32 1, %s26
      %p32 = scmp.ge.s32.totalorder %s31, 1
      %s33 = scalar_select %p32, 0, %s31
      %s34 = sadd.s32 1, %s25
      %s35 = scalar_select %p32, %s34, %s25
      %p36 = scmp.ge.s32.totalorder %s35, 2
      %s37 = scalar_select %p36, 0, %s35
      %s38 = ssub.s32 %s25, %s37
      %p39 = scmp.eq.s32.totalorder %s38, 0
      %s41 = sadd.s32 %s40, 1
      %s42 = scalar_select %p39, %s40, %s41
      %p45 = pneg %p39
      %p46 = scmp.eq.s32.totalorder %s18, 1
      %p47 = por %p45, %p46
      %p48 = scmp.ne.s32.totalorder %s40, %s43
      %p49 = scmp.eq.s32.totalorder %s18, 0
      %p50 = por %p48, %p49
      %p51 = scmp.ne.s32.totalorder %s40, %s43
      %p52 = scmp.eq.s32.totalorder %s23, 1
      %p53 = por %p51, %p52
      %p54 = scmp.ne.s32.totalorder %s43, %s44
      %p55 = scmp.eq.s32.totalorder %s23, 0
      %p56 = por %p54, %p55
      %p57 = scmp.ne.s32.totalorder %s43, %s44
      %p58 = scmp.eq.s32.totalorder %s24, 1
      %p59 = por %p57, %p58
      %p61 = scmp.ne.s32.totalorder %s44, %s60
      %p62 = scmp.eq.s32.totalorder %s24, 0
      %p63 = por %p61, %p62
      %s64 = ssub.s32 %s26, %s33
      %p65 = scmp.eq.s32.totalorder %s64, 0
      %s67 = sadd.s32 %s66, 1
      %s68 = scalar_select %p65, %s66, %s67
      %p71 = pneg %p65
      %p72 = scmp.eq.s32.totalorder %s18, 1
      %p73 = por %p71, %p72
      %p74 = scmp.ne.s32.totalorder %s66, %s69
      %p75 = scmp.eq.s32.totalorder %s18, 0
      %p76 = por %p74, %p75
      %p77 = scmp.ne.s32.totalorder %s66, %s69
      %p78 = scmp.eq.s32.totalorder %s23, 1
      %p79 = por %p77, %p78
      %p80 = scmp.ne.s32.totalorder %s69, %s70
      %p81 = scmp.eq.s32.totalorder %s23, 0
      %p82 = por %p80, %p81
      %p83 = scmp.ne.s32.totalorder %s69, %s70
      %p84 = scmp.eq.s32.totalorder %s24, 1
      %p85 = por %p83, %p84
      %p87 = scmp.ne.s32.totalorder %s70, %s86
      %p88 = scmp.eq.s32.totalorder %s24, 0
      %p89 = por %p87, %p88
      %s90 = ssub.s32 %s26, %s33
      %p91 = scmp.eq.s32.totalorder %s90, 0
      %s93 = sadd.s32 %s92, 1
      %s94 = scalar_select %p91, %s92, %s93
      %p97 = pneg %p91
      %p98 = scmp.eq.s32.totalorder %s18, 1
      %p99 = por %p97, %p98
      %p100 = scmp.ne.s32.totalorder %s92, %s95
      %p101 = scmp.eq.s32.totalorder %s18, 0
      %p102 = por %p100, %p101
      %p103 = scmp.ne.s32.totalorder %s92, %s95
      %p104 = scmp.eq.s32.totalorder %s23, 1
      %p105 = por %p103, %p104
      %p106 = scmp.ne.s32.totalorder %s95, %s96
      %p107 = scmp.eq.s32.totalorder %s23, 0
      %p108 = por %p106, %p107
      %p109 = scmp.ne.s32.totalorder %s95, %s96
      %p110 = scmp.eq.s32.totalorder %s24, 1
      %p111 = por %p109, %p110
      %p113 = scmp.ne.s32.totalorder %s96, %s112
      %p114 = scmp.eq.s32.totalorder %s24, 0
      %p115 = por %p113, %p114
      %s116 = ssub.s32 %s26, %s33
      %p117 = scmp.eq.s32.totalorder %s116, 0
      %s119 = sadd.s32 %s118, 1
      %s120 = scalar_select %p117, %s118, %s119
      %p123 = pneg %p117
      %p124 = scmp.eq.s32.totalorder %s18, 1
      %p125 = por %p123, %p124
      %p126 = scmp.ne.s32.totalorder %s118, %s121
      %p127 = scmp.eq.s32.totalorder %s18, 0
      %p128 = por %p126, %p127
      %p129 = scmp.ne.s32.totalorder %s118, %s121
      %p130 = scmp.eq.s32.totalorder %s23, 1
      %p131 = por %p129, %p130
      %p132 = scmp.ne.s32.totalorder %s121, %s122
      %p133 = scmp.eq.s32.totalorder %s23, 0
      %p134 = por %p132, %p133
      %p135 = scmp.ne.s32.totalorder %s121, %s122
      %p136 = scmp.eq.s32.totalorder %s24, 1
      %p137 = por %p135, %p136
      %p139 = scmp.ne.s32.totalorder %s122, %s138
      %p140 = scmp.eq.s32.totalorder %s24, 0
      %p141 = por %p139, %p140
      %s143 = sadd.s32 %s142, 1
      %p146 = scmp.eq.s32.totalorder %s18, 1
      %p147 = scmp.ne.s32.totalorder %s142, %s144
      %p148 = scmp.eq.s32.totalorder %s18, 0
      %p149 = por %p147, %p148
      %p150 = scmp.ne.s32.totalorder %s142, %s144
      %p151 = scmp.eq.s32.totalorder %s23, 1
      %p152 = por %p150, %p151
      %p153 = scmp.ne.s32.totalorder %s144, %s145
      %p154 = scmp.eq.s32.totalorder %s23, 0
      %p155 = por %p153, %p154
      %p156 = scmp.ne.s32.totalorder %s144, %s145
      %p157 = scmp.eq.s32.totalorder %s24, 1
      %p158 = por %p156, %p157
      %p160 = scmp.ne.s32.totalorder %s145, %s159
      %p161 = scmp.eq.s32.totalorder %s24, 0
      %p162 = por %p160, %p161
      %s163 = ssub.s32 %s25, %s37
      %p164 = scmp.eq.s32.totalorder %s163, 0
      %s166 = sadd.s32 %s165, 1
      %s167 = scalar_select %p164, %s165, %s166
      %p170 = pneg %p164
      %p171 = scmp.eq.s32.totalorder %s18, 1
      %p172 = por %p170, %p171
      %p173 = scmp.ne.s32.totalorder %s165, %s168
      %p174 = scmp.eq.s32.totalorder %s18, 0
      %p175 = por %p173, %p174
      %p176 = scmp.ne.s32.totalorder %s165, %s168
      %p177 = scmp.eq.s32.totalorder %s23, 1
      %p178 = por %p176, %p177
      %p179 = scmp.ne.s32.totalorder %s168, %s169
      %p180 = scmp.eq.s32.totalorder %s23, 0
      %p181 = por %p179, %p180
      %p182 = scmp.ne.s32.totalorder %s168, %s169
      %p183 = scmp.eq.s32.totalorder %s24, 1
      %p184 = por %p182, %p183
      %p186 = scmp.ne.s32.totalorder %s169, %s185
      %p187 = scmp.eq.s32.totalorder %s24, 0
      %p188 = por %p186, %p187
      %p189 = scmp.le.s32.totalorder 1, %s18
      %p190 = scmp.lt.s32.totalorder %s18, 3
      %p191 = pnand %p189, %p190
      %p192 = pneg %p191
      // Predicated region
      $region9: #{tpu_custom_call.1} parent=5 // pred_check
        _
      $region10: #{tpu_custom_call.1} parent=5 // pred_check_branch
        %194 = sbr.rel (%p191) target = $region12
      $region11: #{tpu_custom_call.1} parent=5 // pred_region
        %s195 = ssub.s32 %s18, 1
        // Predicated region
        $region13: #{tpu_custom_call.1} parent=11 // pred_check
          %p196 = pneg %p82
        $region14: #{tpu_custom_call.1} parent=11 // pred_check_branch
          %198 = sbr.rel (%p196) target = $region16
        $region15: #{tpu_custom_call.1} parent=11 // pred_region
          %s200 = ssub.s32 1024, 1024
          %201 = vsyncadd [#allocation6], %s200
          %s202 = smul.addr %s28, 64
          %s203 = scalar_lea.hbm %s1, %s202
          %s204 = sshll.u32 [#allocation5], 4
          %s205 = int_to_ptr.vmem [resolvable:$true] %s204
          %210 = dma.hbm_to_vmem [thread:$0]  %s203, 1024, %s205, [#allocation6], 64, 64, 4
        $region16: #{tpu_custom_call.1} parent=11 // pred_fallthru
          _
        // Predicated region
        $region17: #{tpu_custom_call.1} parent=11 // pred_check
          %p211 = pneg %p108
        $region18: #{tpu_custom_call.1} parent=11 // pred_check_branch
          %213 = sbr.rel (%p211) target = $region20
        $region19: #{tpu_custom_call.1} parent=11 // pred_region
          %p214 = scmp.lt.s32.totalorder %s28, 0
          %s215 = scalar_select %p214, %s28, 0
          %s216 = scalar_lea.vmem %s2, %s215
        $region20: #{tpu_custom_call.1} parent=11 // pred_fallthru
          _
        // Predicated region
        $region21: #{tpu_custom_call.1} parent=11 // pred_check
          %p217 = pneg %p134
        $region22: #{tpu_custom_call.1} parent=11 // pred_check_branch
          %219 = sbr.rel (%p217) target = $region24
        $region23: #{tpu_custom_call.1} parent=11 // pred_region
          %s220 = smul.u32 16, %s28
          %s222 = ssub.s32 1024, 1024
          %223 = vsyncadd [#allocation6], %s222
          %s224 = smul.addr %s220, 64
          %s225 = scalar_lea.hbm %s3, %s224
          %s226 = sshll.u32 [#allocation7], 4
          %s227 = int_to_ptr.vmem [resolvable:$true] %s226
          %232 = dma.hbm_to_vmem [thread:$0]  %s225, 1024, %s227, [#allocation6], 64, 64, 4
        $region24: #{tpu_custom_call.1} parent=11 // pred_fallthru
          _
        // Predicated region
        $region25: #{tpu_custom_call.1} parent=11 // pred_check
          %p233 = pneg %p155
        $region26: #{tpu_custom_call.1} parent=11 // pred_check_branch
          %235 = sbr.rel (%p233) target = $region28
        $region27: #{tpu_custom_call.1} parent=11 // pred_region
          _
        $region28: #{tpu_custom_call.1} parent=11 // pred_fallthru
          _
      $region12: #{tpu_custom_call.1} parent=5 // pred_fallthru
        _
      %p236 = scmp.lt.s32.totalorder %s18, 2
      // Predicated region
      $region29: #{tpu_custom_call.1} parent=5 // pred_check
        %p237 = pneg %p236
      $region30: #{tpu_custom_call.1} parent=5 // pred_check_branch
        %239 = sbr.rel (%p237) target = $region32
      $region31: #{tpu_custom_call.1} parent=5 // pred_region
        // Predicated region
        $region33: #{tpu_custom_call.1} parent=31 // pred_check
          %p240 = pneg %p50
        $region34: #{tpu_custom_call.1} parent=31 // pred_check_branch
          %242 = sbr.rel (%p240) target = $region36
        $region35: #{tpu_custom_call.1} parent=31 // pred_region
          %s243 = sand.u32 %s40, 1
          %s244 = scalar_lea.sflag [#allocation3], %s243
          %s245 = sand.u32 %s40, 1
          %s246 = smul.addr %s245, 4
          %s247 = scalar_lea.vmem [#allocation2], %s246
          %s249 = ssub.s32 64, 64
          %250 = vsyncadd %s244, %s249
          %s251 = smul.addr %s25, 64
          %s252 = scalar_lea.hbm %s0, %s251
          %s254 = sshll.u32 %s247, 4
          %s255 = int_to_ptr.vmem [resolvable:$true] %s254
          %257 = dma.hbm_to_vmem [thread:$0]  %s252, 64, %s255, %s244
        $region36: #{tpu_custom_call.1} parent=31 // pred_fallthru
          _
      $region32: #{tpu_custom_call.1} parent=5 // pred_fallthru
        _
      %p258 = scmp.le.s32.totalorder 1, %s18
      %p259 = scmp.lt.s32.totalorder %s18, 3
      %p260 = pnand %p258, %p259
      %p261 = pneg %p260
      // Predicated region
      $region37: #{tpu_custom_call.1} parent=5 // pred_check
        _
      $region38: #{tpu_custom_call.1} parent=5 // pred_check_branch
        %263 = sbr.rel (%p260) target = $region40
      $region39: #{tpu_custom_call.1} parent=5 // pred_region
        %s264 = ssub.s32 %s18, 1
        %s265 = sand.u32 %s43, 1
        %s266 = scalar_lea.sflag [#allocation3], %s265
        %s267 = sand.u32 %s43, 1
        %s268 = smul.addr %s267, 4
        %s269 = scalar_lea.vmem [#allocation2], %s268
        // Predicated region
        $region41: #{tpu_custom_call.1} parent=39 // pred_check
          %p270 = pneg %p56
        $region42: #{tpu_custom_call.1} parent=39 // pred_check_branch
          %272 = sbr.rel (%p270) target = $region44
        $region43: #{tpu_custom_call.1} parent=39 // pred_region
          %273 = dma.done %s266, 64
        $region44: #{tpu_custom_call.1} parent=39 // pred_fallthru
          _
        // Predicated region
        $region45: #{tpu_custom_call.1} parent=39 // pred_check
          %p274 = pneg %p82
        $region46: #{tpu_custom_call.1} parent=39 // pred_check_branch
          %276 = sbr.rel (%p274) target = $region48
        $region47: #{tpu_custom_call.1} parent=39 // pred_region
          %277 = dma.done [#allocation6], 1024
        $region48: #{tpu_custom_call.1} parent=39 // pred_fallthru
          _
        // Predicated region
        $region49: #{tpu_custom_call.1} parent=39 // pred_check
          %p278 = pneg %p134
        $region50: #{tpu_custom_call.1} parent=39 // pred_check_branch
          %280 = sbr.rel (%p278) target = $region52
        $region51: #{tpu_custom_call.1} parent=39 // pred_region
          %281 = dma.done [#allocation6], 1024
        $region52: #{tpu_custom_call.1} parent=39 // pred_fallthru
          _
        %s282 = sand.u32 %s43, 1
        %s283 = scalar_lea.sflag [#allocation3], %s282
        %s284 = sand.u32 %s43, 1
        %s285 = smul.addr %s284, 4
        %s286 = scalar_lea.vmem [#allocation2], %s285
        %p287 = pneg %p56
        %p288 = pneg %p53
        %p289 = pneg %p82
        %p290 = pneg %p79
        %p291 = scmp.lt.s32.totalorder %s28, 0
        %s292 = scalar_select %p291, %s28, 0
        %s293 = scalar_lea.vmem %s2, %s292
        %p294 = pneg %p108
        %p295 = pneg %p105
        %p296 = pneg %p134
        %p297 = pneg %p131
        %p298 = pneg %p155
        %p299 = pneg %p152
        %p300 = pneg %p181
        %p301 = pneg %p178
        %s302 = sand.u32 %s168, 1
        %s303 = scalar_lea.sflag [#allocation4], %s302
        %s304 = sand.u32 %s168, 1
        %s305 = smul.addr %s304, 8
        %s306 = scalar_lea.vmem [#allocation8], %s305
        %p307 = scmp.lt.s32.totalorder %s28, 0
        %s308 = scalar_select %p307, %s28, 0
        %s309 = scalar_lea.vmem %s2, %s308
        %s310 = smul.u32 16, %s28
        %p312 = scmp.eq.s32.totalorder %s28, 0
        // Predicated region
        $region53: #{tpu_custom_call.1} parent=39 // pred_check
          %p313 = pneg %p312
        $region54: #{tpu_custom_call.1} parent=39 // pred_check_branch
          %315 = sbr.rel (%p313) target = $region56
        $region55: #{tpu_custom_call.1} parent=39 // pred_region
          %316 = vst [vmem:[%s306] sm:$0xff] 0.0
        $region56: #{tpu_custom_call.1} parent=39 // pred_fallthru
          _
        %v317 = vld [vmem:[%s269] sm:$0xf]
        %v318 = vld [vmem:[#allocation5] sm:$0xf]
        %v319 = vld [vmem:[#allocation5 + $0x4] sm:$0xf]
        %v320 = vld [vmem:[#allocation5 + $0x8] sm:$0xf]
        %v321 = vld [vmem:[#allocation5 + $0xc] sm:$0xf]
        %v322 = vld [vmem:[#allocation5 + $0x10] sm:$0xf]
        %v323 = vld [vmem:[#allocation5 + $0x14] sm:$0xf]
        %v324 = vld [vmem:[#allocation5 + $0x18] sm:$0xf]
        %v325 = vld [vmem:[#allocation5 + $0x1c] sm:$0xf]
        %v326 = vld [vmem:[#allocation5 + $0x20] sm:$0xf]
        %v327 = vld [vmem:[#allocation5 + $0x24] sm:$0xf]
        %v328 = vld [vmem:[#allocation5 + $0x28] sm:$0xf]
        %v329 = vld [vmem:[#allocation5 + $0x2c] sm:$0xf]
        %v330 = vld [vmem:[#allocation5 + $0x30] sm:$0xf]
        %v331 = vld [vmem:[#allocation5 + $0x34] sm:$0xf]
        %v332 = vld [vmem:[#allocation5 + $0x38] sm:$0xf]
        %v333 = vld [vmem:[#allocation5 + $0x3c] sm:$0xf]
        %v334 = vld [vmem:[%s309] sm:$0x1]
        %v336 = vlaneseq
        %v337 = vshrl.u32 %v336, 7
        %v338 = vsub.s32 0, %v337
        %v339 = vrot.slane %v334, %v338
        %v357 = vunpack.c.l.b16 %v318
        %v358 = vunpack.c.l.b16 %v319
        %v359 = vunpack.c.l.b16 %v320
        %v360 = vunpack.c.l.b16 %v321
        %v361 = vunpack.c.l.b16 %v322
        %v362 = vunpack.c.l.b16 %v323
        %v363 = vunpack.c.l.b16 %v324
        %v364 = vunpack.c.l.b16 %v325
        %v365 = vunpack.c.l.b16 %v326
        %v366 = vunpack.c.l.b16 %v327
        %v367 = vunpack.c.l.b16 %v328
        %v368 = vunpack.c.l.b16 %v329
        %v369 = vunpack.c.l.b16 %v330
        %v370 = vunpack.c.l.b16 %v331
        %v371 = vunpack.c.l.b16 %v332
        %v372 = vunpack.c.l.b16 %v333
        %v373 = vpack.c.b16 %v358, %v357
        %v374 = vpack.c.b16 %v360, %v359
        %v375 = vpack.c.b16 %v362, %v361
        %v376 = vpack.c.b16 %v364, %v363
        %v377 = vpack.c.b16 %v366, %v365
        %v378 = vpack.c.b16 %v368, %v367
        %v379 = vpack.c.b16 %v370, %v369
        %v380 = vpack.c.b16 %v372, %v371
        %389 = vmatprep.subr.bf16.mxu0 0
        %390 = vmatpush1.bf16.msra.mxu0 %v380
        %391 = vmatprep.subr.bf16.mxu0 0
        %392 = vmatpush1.bf16.msra.mxu0 %v379
        %393 = vmatprep.subr.bf16.mxu0 0
        %394 = vmatpush1.bf16.msra.mxu0 %v378
        %395 = vmatprep.subr.bf16.mxu0 0
        %396 = vmatpush1.bf16.msra.mxu0 %v377
        %397 = vmatprep.subr.bf16.mxu0 0
        %398 = vmatpush1.bf16.msra.mxu0 %v376
        %399 = vmatprep.subr.bf16.mxu0 0
        %400 = vmatpush1.bf16.msra.mxu0 %v375
        %401 = vmatprep.subr.bf16.mxu0 0
        %402 = vmatpush1.bf16.msra.mxu0 %v374
        %403 = vmatprep.subr.bf16.mxu0 0
        %404 = vmatpush1.bf16.msra.mxu0 %v373
        %405 = vmatprep.subr.bf16.mxu0 0
        %406 = vmatpush2.bf16.msra.mxu0 0
        %407 = vmatprep.subr.bf16.mxu0 0
        %408 = vmatpush2.bf16.msra.mxu0 0
        %409 = vmatprep.subr.bf16.mxu0 0
        %410 = vmatpush2.bf16.msra.mxu0 0
        %411 = vmatprep.subr.bf16.mxu0 0
        %412 = vmatpush2.bf16.msra.mxu0 0
        %413 = vmatprep.subr.bf16.mxu0 0
        %414 = vmatpush2.bf16.msra.mxu0 0
        %415 = vmatprep.subr.bf16.mxu0 0
        %416 = vmatpush2.bf16.msra.mxu0 0
        %417 = vmatprep.subr.bf16.mxu0 0
        %418 = vmatpush2.bf16.msra.mxu0 0
        %419 = vmatprep.subr.bf16.mxu0 0
        %420 = vmatpush2.bf16.msra.mxu0 0
        %421 = vmatprep.mubr.bf16.mxu0 0
        %422 = vmatmul.mubr.bf16.gmra.mxu0 %v317
        %v423 = vpop.f32.mrf.mxu0
        %v424 = vadd.f32 %v339, %v423
        %v425 = vpop.f32.mrf.mxu0
        %v426 = vpop.f32.mrf.mxu0
        %v427 = vpop.f32.mrf.mxu0
        %428 = vdwg.mxu0
        %v429 = vmax.f32 %v424, 0.0
        %v430 = vld [vmem:[%s306] sm:$0xff]
        %v431 = vpack.c.bf16 %v429, %v429
        %v432 = vld [vmem:[#allocation7] sm:$0xf]
        %v433 = vld [vmem:[#allocation7 + $0x4] sm:$0xf]
        %v434 = vld [vmem:[#allocation7 + $0x8] sm:$0xf]
        %v435 = vld [vmem:[#allocation7 + $0xc] sm:$0xf]
        %v436 = vld [vmem:[#allocation7 + $0x10] sm:$0xf]
        %v437 = vld [vmem:[#allocation7 + $0x14] sm:$0xf]
        %v438 = vld [vmem:[#allocation7 + $0x18] sm:$0xf]
        %v439 = vld [vmem:[#allocation7 + $0x1c] sm:$0xf]
        %v440 = vld [vmem:[#allocation7 + $0x20] sm:$0xf]
        %v441 = vld [vmem:[#allocation7 + $0x24] sm:$0xf]
        %v442 = vld [vmem:[#allocation7 + $0x28] sm:$0xf]
        %v443 = vld [vmem:[#allocation7 + $0x2c] sm:$0xf]
        %v444 = vld [vmem:[#allocation7 + $0x30] sm:$0xf]
        %v445 = vld [vmem:[#allocation7 + $0x34] sm:$0xf]
        %v446 = vld [vmem:[#allocation7 + $0x38] sm:$0xf]
        %v447 = vld [vmem:[#allocation7 + $0x3c] sm:$0xf]
        %v464 = vunpack.c.l.b16 %v432
        %v465 = vunpack.c.l.b16 %v433
        %v466 = vunpack.c.l.b16 %v434
        %v467 = vunpack.c.l.b16 %v435
        %v468 = vunpack.c.l.b16 %v436
        %v469 = vunpack.c.l.b16 %v437
        %v470 = vunpack.c.l.b16 %v438
        %v471 = vunpack.c.l.b16 %v439
        %v472 = vunpack.c.l.b16 %v440
        %v473 = vunpack.c.l.b16 %v441
        %v474 = vunpack.c.l.b16 %v442
        %v475 = vunpack.c.l.b16 %v443
        %v476 = vunpack.c.l.b16 %v444
        %v477 = vunpack.c.l.b16 %v445
        %v478 = vunpack.c.l.b16 %v446
        %v479 = vunpack.c.l.b16 %v447
        %v480 = vpack.c.b16 %v465, %v464
        %v481 = vpack.c.b16 %v467, %v466
        %v482 = vpack.c.b16 %v469, %v468
        %v483 = vpack.c.b16 %v471, %v470
        %v484 = vpack.c.b16 %v473, %v472
        %v485 = vpack.c.b16 %v475, %v474
        %v486 = vpack.c.b16 %v477, %v476
        %v487 = vpack.c.b16 %v479, %v478
        %496 = vmatprep.subr.bf16.mxu0 0
        %497 = vmatpush1.bf16.msra.mxu0 %v487
        %498 = vmatprep.subr.bf16.mxu0 0
        %499 = vmatpush1.bf16.msra.mxu0 %v486
        %500 = vmatprep.subr.bf16.mxu0 0
        %501 = vmatpush1.bf16.msra.mxu0 %v485
        %502 = vmatprep.subr.bf16.mxu0 0
        %503 = vmatpush1.bf16.msra.mxu0 %v484
        %504 = vmatprep.subr.bf16.mxu0 0
        %505 = vmatpush1.bf16.msra.mxu0 %v483
        %506 = vmatprep.subr.bf16.mxu0 0
        %507 = vmatpush1.bf16.msra.mxu0 %v482
        %508 = vmatprep.subr.bf16.mxu0 0
        %509 = vmatpush1.bf16.msra.mxu0 %v481
        %510 = vmatprep.subr.bf16.mxu0 0
        %511 = vmatpush1.bf16.msra.mxu0 %v480
        %512 = vmatprep.subr.bf16.mxu0 0
        %513 = vmatpush2.bf16.msra.mxu0 0
        %514 = vmatprep.subr.bf16.mxu0 0
        %515 = vmatpush2.bf16.msra.mxu0 0
        %516 = vmatprep.subr.bf16.mxu0 0
        %517 = vmatpush2.bf16.msra.mxu0 0
        %518 = vmatprep.subr.bf16.mxu0 0
        %519 = vmatpush2.bf16.msra.mxu0 0
        %520 = vmatprep.subr.bf16.mxu0 0
        %521 = vmatpush2.bf16.msra.mxu0 0
        %522 = vmatprep.subr.bf16.mxu0 0
        %523 = vmatpush2.bf16.msra.mxu0 0
        %524 = vmatprep.subr.bf16.mxu0 0
        %525 = vmatpush2.bf16.msra.mxu0 0
        %526 = vmatprep.subr.bf16.mxu0 0
        %527 = vmatpush2.bf16.msra.mxu0 0
        %528 = vmatprep.mubr.bf16.mxu0 0
        %529 = vmatmul.mubr.bf16.gmra.mxu0 %v431
        %v530 = vpop.f32.mrf.mxu0
        %v531 = vadd.f32 0.0, %v530
        %v532 = vpop.f32.mrf.mxu0
        %v533 = vpop.f32.mrf.mxu0
        %v534 = vpop.f32.mrf.mxu0
        %535 = vdwg.mxu0
        %v536 = vadd.f32 %v430, %v531
        %537 = vst [vmem:[%s306] sm:$0xff] %v536
        // Predicated region
        $region57: #{tpu_custom_call.1} parent=39 // pred_check
          %p538 = pneg %p312
        $region58: #{tpu_custom_call.1} parent=39 // pred_check_branch
          %540 = sbr.rel (%p538) target = $region60
        $region59: #{tpu_custom_call.1} parent=39 // pred_region
          %v541 = vld [vmem:[%s306] sm:$0xff]
          %v542 = vld [vmem:[%s4] sm:$0x1]
          %v544 = vlaneseq
          %v545 = vshrl.u32 %v544, 7
          %v546 = vsub.s32 0, %v545
          %v547 = vrot.slane %v542, %v546
          %v549 = vadd.f32 %v541, %v547
          %550 = vst [vmem:[%s306] sm:$0xff] %v549
        $region60: #{tpu_custom_call.1} parent=39 // pred_fallthru
          _
        %s551 = sand.u32 %s168, 1
        %s552 = scalar_lea.sflag [#allocation4], %s551
        %s553 = sand.u32 %s168, 1
        %s554 = smul.addr %s553, 8
        %s555 = scalar_lea.vmem [#allocation8], %s554
        // Predicated region
        $region61: #{tpu_custom_call.1} parent=39 // pred_check
          %p556 = pneg %p178
        $region62: #{tpu_custom_call.1} parent=39 // pred_check_branch
          %558 = sbr.rel (%p556) target = $region64
        $region63: #{tpu_custom_call.1} parent=39 // pred_region
          %s560 = ssub.s32 128, 128
          %561 = vsyncadd %s552, %s560
          %s562 = smul.addr %s27, 128
          %s563 = scalar_lea.hbm %s5, %s562
          %s565 = sshll.u32 %s555, 4
          %s566 = int_to_ptr.vmem [resolvable:$true] %s565
          %568 = dma.vmem_to_hbm [thread:$0]  %s566, 128, %s563, %s552
        $region64: #{tpu_custom_call.1} parent=39 // pred_fallthru
          _
      $region40: #{tpu_custom_call.1} parent=5 // pred_fallthru
        _
      %p569 = scmp.le.s32.totalorder 2, %s18
      // Predicated region
      $region65: #{tpu_custom_call.1} parent=5 // pred_check
        %p570 = pneg %p569
      $region66: #{tpu_custom_call.1} parent=5 // pred_check_branch
        %572 = sbr.rel (%p570) target = $region68
      $region67: #{tpu_custom_call.1} parent=5 // pred_region
        %s573 = ssub.s32 %s18, 2
        // Predicated region
        $region69: #{tpu_custom_call.1} parent=67 // pred_check
          %p574 = pneg %p184
        $region70: #{tpu_custom_call.1} parent=67 // pred_check_branch
          %576 = sbr.rel (%p574) target = $region72
        $region71: #{tpu_custom_call.1} parent=67 // pred_region
          %s577 = sand.u32 %s169, 1
          %s578 = scalar_lea.sflag [#allocation4], %s577
          %s579 = sand.u32 %s169, 1
          %s580 = smul.addr %s579, 8
          %s581 = scalar_lea.vmem [#allocation8], %s580
          %582 = dma.done %s578, 128
        $region72: #{tpu_custom_call.1} parent=67 // pred_fallthru
          _
      $region68: #{tpu_custom_call.1} parent=5 // pred_fallthru
        _
    $region6: #{tpu_custom_call.1} parent=1 // loop_footer
      %s22 = sadd.s32 1, %s18
    $region7: #{tpu_custom_call.1} parent=1 // loop_footer_branch
      %17 = sbr.rel target = $region3
    $region8: #{tpu_custom_call.1} parent=1 // loop_exit
      _
    %583 = vsyncpa [#allocation3], 1
    %s584 = scalar_lea.sflag [#allocation3], 1
    %585 = vsyncpa %s584, 1
    %586 = vsyncpa [#allocation6], 1
    %587 = vsyncpa [#allocation4], 1
    %s588 = scalar_lea.sflag [#allocation4], 1
    %589 = vsyncpa %s588, 1

</llo_original>
